<compile_context>
chip_gen: v5e
topology: v5e:2x2
jax: 0.10.0
libtpu: 0.0.40
codegen_flags: <defaults>
</compile_context>

<pallas_src>
import functools
import math

import jax
import jax.numpy as jnp
from jax import lax
from jax.experimental import pallas as pl
from jax.experimental.pallas import tpu as pltpu


MARGIN = 0.5
SCALE = 64.0
NORM_EPS = 1e-12          # torch.nn.functional.normalize default eps
CLAMP_EPS = 1e-7


def _arcface_kernel(emb_ref, wn_ref, labels_ref, loss_ref,
                    m_ref, l_ref, picked_ref, *, margin, scale):
    k = pl.program_id(1)
    num_k = pl.num_programs(1)
    tile_c = wn_ref.shape[1]

    cos_m = math.cos(margin)
    sin_m = math.sin(margin)

    # --- per-batch-tile init: reset online-logsumexp accumulators ------------
    @pl.when(k == 0)
    def _init():
        m_ref[...] = jnp.full_like(m_ref, -jnp.inf)
        l_ref[...] = jnp.zeros_like(l_ref)
        picked_ref[...] = jnp.zeros_like(picked_ref)

    # --- cosine = emb_n @ w_n  (pre-normalized; f32 accumulation on MXU) -----
    cosine = lax.dot_general(
        emb_ref[...], wn_ref[...],
        dimension_numbers=(((1,), (0,)), ((), ())),
        preferred_element_type=jnp.float32)                          # (TB, TC)
    cosine = jnp.clip(cosine, -1.0 + CLAMP_EPS, 1.0 - CLAMP_EPS)
    logits = cosine * scale                                          # (TB, TC)

    # --- target mask for this class tile (lane iota vs. local label) ---------
    local_label = labels_ref[...] - k * tile_c                       # (TB, 1) i32
    class_iota = lax.broadcasted_iota(jnp.int32, (1, tile_c), 1)     # (1, TC)
    is_target = class_iota == local_label                            # (TB, TC)
    has_target = jnp.logical_and(local_label >= 0, local_label < tile_c)
    ht = has_target.astype(jnp.float32)                              # (TB, 1)

    # --- margin on the gathered target cosine only (a (TB,1) vector) ---------
    target_cos = jnp.sum(jnp.where(is_target, cosine, 0.0),
                         axis=1, keepdims=True)                      # (TB, 1)
    sin_theta = jnp.sqrt(jnp.maximum(1.0 - target_cos * target_cos, 0.0))
    target_logit_plain = target_cos * scale
    # cos(acos(c) + m) == c*cos(m) - sqrt(1 - c^2)*sin(m)   (theta in [0, pi])
    target_logit_marg = (target_cos * cos_m - sin_theta * sin_m) * scale

    # --- online logsumexp over the true logits (target entry = margined) -----
    m_prev = m_ref[...]
    tile_max = jnp.max(logits, axis=1, keepdims=True)
    m_cand = jnp.where(has_target,
                       jnp.maximum(tile_max, target_logit_marg), tile_max)
    m_new = jnp.maximum(m_prev, m_cand)
    alpha = jnp.exp(m_prev - m_new)
    tile_sum = jnp.sum(jnp.exp(logits - m_new), axis=1, keepdims=True)
    # swap the plain target term (included in tile_sum) for the margined one
    corr = ht * (jnp.exp(target_logit_marg - m_new)
                 - jnp.exp(target_logit_plain - m_new))
    l_ref[...] = l_ref[...] * alpha + tile_sum + corr
    m_ref[...] = m_new
    picked_ref[...] += ht * target_logit_marg

    # --- finalize per-sample loss ---------------------------------------------
    @pl.when(k == num_k - 1)
    def _finalize():
        loss_ref[...] = m_ref[...] + jnp.log(l_ref[...]) - picked_ref[...]


def _largest_divisor_tile(n, align, cap):
    """Largest multiple of `align` that divides n and is <= cap (or n itself)."""
    if n <= cap:
        return n
    t = (cap // align) * align
    while t >= align and n % t != 0:
        t -= align
    if t < align:
        raise ValueError(f"cannot tile {n} with alignment {align}")
    return t


def _vmem_capacity_bytes():
    try:
        cap = getattr(pltpu.get_tpu_info(), "vmem_capacity_bytes", None)
        if cap:
            return int(cap)
    except Exception:
        pass
    return 64 * 1024 * 1024   # conservative (v7x per-core physical VMEM)


def arcface_loss(embeddings, weight, labels, *, margin=MARGIN, scale=SCALE,
                 tile_b=None, tile_c=None, matmul_dtype=jnp.bfloat16):
    """embeddings: (B, D), weight: (C, D), labels: (B,) int -> scalar f32."""
    B, D = embeddings.shape
    C, D2 = weight.shape
    assert D == D2, (D, D2)

    # --- hoisted L2 normalization in f32, cast-last to the MXU dtype ---------
    emb32 = embeddings.astype(jnp.float32)
    emb_n = emb32 * lax.rsqrt(
        jnp.maximum(jnp.sum(emb32 * emb32, axis=1, keepdims=True),
                    NORM_EPS * NORM_EPS))
    w32 = weight.astype(jnp.float32)
    w_n = w32 * lax.rsqrt(
        jnp.maximum(jnp.sum(w32 * w32, axis=1, keepdims=True),
                    NORM_EPS * NORM_EPS))
    # Lane-dense class axis: (D, C) so class tiles are (D, TILE_C) blocks;
    # cast in the wrapper so the HBM stream really is matmul_dtype-wide.
    w_nt = jnp.transpose(w_n).astype(matmul_dtype)      # (D, C)
    emb_n = emb_n.astype(matmul_dtype)                  # (B, D)
    labels_2d = labels.reshape(B, 1).astype(jnp.int32)

    w_bytes = jnp.dtype(matmul_dtype).itemsize

    # --- tile sizing -----------------------------------------------------------
    if tile_b is None:
        # Weight HBM traffic scales with B/tile_b, so take big batch tiles.
        # TODO(synk): on v7x keep B // tile_b an even number >= 2 so the
        # "parallel" batch axis feeds both TensorCores.
        tile_b = _largest_divisor_tile(B, 8, 512)
    if tile_c is None:
        # Keep weight double-buffer + live (tile_b, tile_c) f32 intermediates
        # under a ~40 MiB working budget (fits v7x's 64 MiB physical VMEM).
        budget = 40 * 1024 * 1024
        per_c = 2 * D * w_bytes + 8 * tile_b * 4
        cap_c = min(4096, max(128, (budget // per_c) // 128 * 128))
        tile_c = _largest_divisor_tile(C, 128, cap_c)
    assert B % tile_b == 0 and (tile_b % 8 == 0 or tile_b == B), (B, tile_b)
    assert C % tile_c == 0 and (tile_c % 128 == 0 or tile_c == C), (C, tile_c)

    n_b = B // tile_b
    n_c = C // tile_c

    # --- VMEM limit derived from the actual tile sizes ------------------------
    est = (2 * D * tile_c * w_bytes          # weight double buffer
           + 2 * tile_b * D * w_bytes        # embedding double buffer
           + 4 * tile_b * 4 * 2              # labels + loss blocks
           + 3 * tile_b * 4                  # accumulator scratch
           + 8 * tile_b * tile_c * 4)        # live f32 intermediates headroom
    vmem_limit = int(min(max(int(est * 1.25), 32 * 1024 * 1024),
                         int(_vmem_capacity_bytes() * 0.85)))

    kernel = functools.partial(_arcface_kernel, margin=margin, scale=scale)

    per_sample = pl.pallas_call(
        kernel,
        out_shape=jax.ShapeDtypeStruct((B, 1), jnp.float32),
        grid=(n_b, n_c),
        in_specs=[
            pl.BlockSpec((tile_b, D), lambda b, k: (b, 0)),   # normalized emb
            # TODO(synk): pipeline_mode=pl.Buffered(3) here if a v7x profile
            # shows exposed weight DMA after the bf16 switch.
            pl.BlockSpec((D, tile_c), lambda b, k: (0, k)),   # normalized W^T
            pl.BlockSpec((tile_b, 1), lambda b, k: (b, 0)),   # labels
        ],
        out_specs=pl.BlockSpec((tile_b, 1), lambda b, k: (b, 0)),
        scratch_shapes=[
            pltpu.VMEM((tile_b, 1), jnp.float32),   # running max m
            pltpu.VMEM((tile_b, 1), jnp.float32),   # running sum l
            pltpu.VMEM((tile_b, 1), jnp.float32),   # picked (margined) logit
        ],
        compiler_params=pltpu.CompilerParams(
            dimension_semantics=("parallel", "arbitrary"),
            vmem_limit_bytes=vmem_limit,
        ),
        cost_estimate=pl.CostEstimate(
            flops=2 * B * C * D,
            transcendentals=B * C + B * n_c + B,
            bytes_accessed=(n_b * C * D * w_bytes      # weight re-streamed / batch tile
                            + B * D * w_bytes + B * 4 + B * 4),
        ),
    )(emb_n, w_nt, labels_2d)

    # cross_entropy mean reduction (kept outside so the batch axis is parallel)
    return jnp.mean(per_sample)


def _reference(embeddings, weight, labels):
    emb = embeddings / jnp.maximum(
        jnp.linalg.norm(embeddings, axis=1, keepdims=True), NORM_EPS)
    w = weight / jnp.maximum(
        jnp.linalg.norm(weight, axis=1, keepdims=True), NORM_EPS)
    cosine = jnp.clip(emb @ w.T, -1.0 + CLAMP_EPS, 1.0 - CLAMP_EPS)
    target = jnp.cos(jnp.arccos(cosine) + MARGIN)
    one_hot = jax.nn.one_hot(labels, weight.shape[0], dtype=jnp.float32)
    out = (cosine * (1.0 - one_hot) + target * one_hot) * SCALE
    logp = jax.nn.log_softmax(out, axis=1)
    return -jnp.mean(jnp.sum(logp * one_hot, axis=1))


if __name__ == "__main__":
    # Small but tile-able shapes.
    B, D, C = 16, 128, 384

    key = jax.random.PRNGKey(0)
    k_emb, k_w, k_lbl = jax.random.split(key, 3)

    embeddings = jax.random.normal(k_emb, (B, D), dtype=jnp.float32)
    # nn.init.xavier_uniform_ on (num_classes, embedding_dim)
    bound = math.sqrt(6.0 / (C + D))
    weight = jax.random.uniform(k_w, (C, D), minval=-bound, maxval=bound,
                                dtype=jnp.float32)
    labels = jax.random.randint(k_lbl, (B,), 0, C, dtype=jnp.int32)

    ref = _reference(embeddings, weight, labels)

    # f32 MXU path with explicit small tiles (grid = 2 x 3): tight check.
    loss_f32 = jax.block_until_ready(
        arcface_loss(embeddings, weight, labels, tile_b=8, tile_c=128,
                     matmul_dtype=jnp.float32))
    assert jnp.isfinite(loss_f32), "non-finite f32 loss"
    assert jnp.allclose(loss_f32, ref, rtol=1e-4, atol=1e-4), (loss_f32, ref)

    # Default path: bf16 MXU (2-byte weight stream), auto tile sizing; looser
    # check since bf16 cosine error is amplified by scale=64.
    loss_bf16 = jax.block_until_ready(arcface_loss(embeddings, weight, labels))
    assert jnp.isfinite(loss_bf16), "non-finite bf16 loss"
    assert abs(float(loss_bf16) - float(ref)) < 1.0, (loss_bf16, ref)

    print("KERNEL_OK")
</pallas_src>

<mosaic_0001>
module attributes {stable_mosaic.version = 11 : i64} {
  func.func @_arcface_kernel(%arg0: i32, %arg1: i32, %arg2: memref<8x128xf32, #tpu.memory_space<vmem>>, %arg3: memref<128x128xf32, #tpu.memory_space<vmem>>, %arg4: memref<8x1xi32, #tpu.memory_space<vmem>>, %arg5: memref<8x1xf32, #tpu.memory_space<vmem>>, %arg6: memref<8x1xf32, #tpu.memory_space<vmem>>, %arg7: memref<8x1xf32, #tpu.memory_space<vmem>>, %arg8: memref<8x1xf32, #tpu.memory_space<vmem>>) attributes {dimension_semantics = [#tpu.dimension_semantics<parallel>, #tpu.dimension_semantics<arbitrary>], iteration_bounds = array<i64: 2, 3>, scalar_prefetch = 0 : i64, scratch_operands = 3 : i64, tpu.core_type = #tpu.core_type<tc>, window_params = [{transform_indices = @transform_0, window_bounds = array<i64: 8, 128>}, {transform_indices = @transform_1, window_bounds = array<i64: 128, 128>}, {transform_indices = @transform_2, window_bounds = array<i64: 8, 1>}, {transform_indices = @transform_3, window_bounds = array<i64: 8, 1>}]} {
    %c0_i32 = arith.constant 0 : i32
    %0 = arith.cmpi eq, %arg1, %c0_i32 : i32
    %1 = arith.extui %0 : i1 to i32
    %c0_i32_0 = arith.constant 0 : i32
    %2 = arith.cmpi ne, %1, %c0_i32_0 : i32
    scf.if %2 {
      %cst_34 = arith.constant 0xFF800000 : f32
      %78 = vector.broadcast %cst_34 : f32 to vector<8x1xf32>
      %c0_35 = arith.constant 0 : index
      %c0_36 = arith.constant 0 : index
      %79 = vector.load %arg6[%c0_35, %c0_36] : memref<8x1xf32, #tpu.memory_space<vmem>>, vector<8x1xf32>
      tpu.vector_store %arg6[%c0_35, %c0_36], %78 {strides = array<i32>} : memref<8x1xf32, #tpu.memory_space<vmem>>, vector<8x1xf32>,
      %cst_37 = arith.constant 0.000000e+00 : f32
      %80 = vector.broadcast %cst_37 : f32 to vector<8x1xf32>
      %c0_38 = arith.constant 0 : index
      %c0_39 = arith.constant 0 : index
      %81 = vector.load %arg7[%c0_38, %c0_39] : memref<8x1xf32, #tpu.memory_space<vmem>>, vector<8x1xf32>
      tpu.vector_store %arg7[%c0_38, %c0_39], %80 {strides = array<i32>} : memref<8x1xf32, #tpu.memory_space<vmem>>, vector<8x1xf32>,
      %cst_40 = arith.constant 0.000000e+00 : f32
      %82 = vector.broadcast %cst_40 : f32 to vector<8x1xf32>
      %c0_41 = arith.constant 0 : index
      %c0_42 = arith.constant 0 : index
      %83 = vector.load %arg8[%c0_41, %c0_42] : memref<8x1xf32, #tpu.memory_space<vmem>>, vector<8x1xf32>
      tpu.vector_store %arg8[%c0_41, %c0_42], %82 {strides = array<i32>} : memref<8x1xf32, #tpu.memory_space<vmem>>, vector<8x1xf32>,
    } else {
    }
    %c0 = arith.constant 0 : index
    %c0_1 = arith.constant 0 : index
    %3 = vector.load %arg2[%c0, %c0_1] : memref<8x128xf32, #tpu.memory_space<vmem>>, vector<8x128xf32>
    %c0_2 = arith.constant 0 : index
    %c0_3 = arith.constant 0 : index
    %4 = vector.load %arg3[%c0_2, %c0_3] : memref<128x128xf32, #tpu.memory_space<vmem>>, vector<128x128xf32>
    %cst = arith.constant dense<0.000000e+00> : vector<8x128xf32>
    %5 = tpu.matmul %3, %4, %cst {dimension_numbers = #tpu.dot_dimension_numbers<[1], [0], [0], [1], [0, 0, 1, 1], [], []>} : vector<8x128xf32>, vector<128x128xf32>, vector<8x128xf32> -> vector<8x128xf32>
    %cst_4 = arith.constant -0.99999988 : f32
    %cst_5 = arith.constant 0.99999988 : f32
    %6 = vector.broadcast %cst_4 : f32 to vector<8x128xf32>
    %7 = arith.maximumf %6, %5 : vector<8x128xf32>
    %8 = vector.broadcast %cst_5 : f32 to vector<8x128xf32>
    %9 = arith.minimumf %8, %7 : vector<8x128xf32>
    %cst_6 = arith.constant 6.400000e+01 : f32
    %10 = vector.broadcast %cst_6 : f32 to vector<8x128xf32>
    %11 = arith.mulf %9, %10 : vector<8x128xf32>
    %c0_7 = arith.constant 0 : index
    %c0_8 = arith.constant 0 : index
    %12 = vector.load %arg4[%c0_7, %c0_8] : memref<8x1xi32, #tpu.memory_space<vmem>>, vector<8x1xi32>
    %c128_i32 = arith.constant 128 : i32
    %13 = arith.muli %arg1, %c128_i32 : i32
    %14 = vector.broadcast %13 : i32 to vector<8x1xi32>
    %15 = arith.subi %12, %14 : vector<8x1xi32>
    %16 = tpu.iota {dimensions = array<i32: 1>} : vector<1x128xi32>
    %17 = vector.broadcast %16 : vector<1x128xi32> to vector<8x128xi32>
    %18 = vector.broadcast %15 : vector<8x1xi32> to vector<8x128xi32>
    %19 = arith.cmpi eq, %17, %18 : vector<8x128xi32>
    %c0_i32_9 = arith.constant 0 : i32
    %20 = vector.broadcast %c0_i32_9 : i32 to vector<8x1xi32>
    %21 = arith.cmpi sge, %15, %20 : vector<8x1xi32>
    %c128_i32_10 = arith.constant 128 : i32
    %22 = vector.broadcast %c128_i32_10 : i32 to vector<8x1xi32>
    %23 = arith.cmpi slt, %15, %22 : vector<8x1xi32>
    %24 = arith.andi %21, %23 : vector<8x1xi1>
    %25 = arith.extui %24 : vector<8x1xi1> to vector<8x1xi32>
    %26 = arith.sitofp %25 : vector<8x1xi32> to vector<8x1xf32>
    %cst_11 = arith.constant 0.000000e+00 : f32
    %27 = vector.broadcast %cst_11 : f32 to vector<8x128xf32>
    %28 = arith.select %19, %9, %27 : vector<8x128xi1>, vector<8x128xf32>
    %cst_12 = arith.constant dense<0.000000e+00> : vector<8xf32>
    %29 = vector.multi_reduction <add>, %28, %cst_12 [1] : vector<8x128xf32> to vector<8xf32>
    %30 = vector.shape_cast %29 : vector<8xf32> to vector<8x1xf32>
    %31 = arith.mulf %30, %30 : vector<8x1xf32>
    %cst_13 = arith.constant 1.000000e+00 : f32
    %32 = vector.broadcast %cst_13 : f32 to vector<8x1xf32>
    %33 = arith.subf %32, %31 : vector<8x1xf32>
    %cst_14 = arith.constant 0.000000e+00 : f32
    %34 = vector.broadcast %cst_14 : f32 to vector<8x1xf32>
    %35 = arith.maximumf %33, %34 : vector<8x1xf32>
    %36 = math.sqrt %35 : vector<8x1xf32>
    %cst_15 = arith.constant 6.400000e+01 : f32
    %37 = vector.broadcast %cst_15 : f32 to vector<8x1xf32>
    %38 = arith.mulf %30, %37 : vector<8x1xf32>
    %cst_16 = arith.constant 0.87758255 : f32
    %39 = vector.broadcast %cst_16 : f32 to vector<8x1xf32>
    %40 = arith.mulf %30, %39 : vector<8x1xf32>
    %cst_17 = arith.constant 0.47942555 : f32
    %41 = vector.broadcast %cst_17 : f32 to vector<8x1xf32>
    %42 = arith.mulf %36, %41 : vector<8x1xf32>
    %43 = arith.subf %40, %42 : vector<8x1xf32>
    %cst_18 = arith.constant 6.400000e+01 : f32
    %44 = vector.broadcast %cst_18 : f32 to vector<8x1xf32>
    %45 = arith.mulf %43, %44 : vector<8x1xf32>
    %c0_19 = arith.constant 0 : index
    %c0_20 = arith.constant 0 : index
    %46 = vector.load %arg6[%c0_19, %c0_20] : memref<8x1xf32, #tpu.memory_space<vmem>>, vector<8x1xf32>
    %cst_21 = arith.constant dense<0xFF800000> : vector<8xf32>
    %47 = vector.multi_reduction <maximumf>, %11, %cst_21 [1] : vector<8x128xf32> to vector<8xf32>
    %48 = vector.shape_cast %47 : vector<8xf32> to vector<8x1xf32>
    %49 = arith.maximumf %48, %45 : vector<8x1xf32>
    %50 = arith.select %24, %49, %48 : vector<8x1xi1>, vector<8x1xf32>
    %51 = arith.maximumf %46, %50 : vector<8x1xf32>
    %52 = arith.subf %46, %51 : vector<8x1xf32>
    %53 = math.exp %52 : vector<8x1xf32>
    %54 = vector.broadcast %51 : vector<8x1xf32> to vector<8x128xf32>
    %55 = arith.subf %11, %54 : vector<8x128xf32>
    %56 = math.exp %55 : vector<8x128xf32>
    %cst_22 = arith.constant dense<0.000000e+00> : vector<8xf32>
    %57 = vector.multi_reduction <add>, %56, %cst_22 [1] : vector<8x128xf32> to vector<8xf32>
    %58 = vector.shape_cast %57 : vector<8xf32> to vector<8x1xf32>
    %59 = arith.subf %45, %51 : vector<8x1xf32>
    %60 = math.exp %59 : vector<8x1xf32>
    %61 = arith.subf %38, %51 : vector<8x1xf32>
    %62 = math.exp %61 : vector<8x1xf32>
    %63 = arith.subf %60, %62 : vector<8x1xf32>
    %64 = arith.mulf %26, %63 : vector<8x1xf32>
    %c0_23 = arith.constant 0 : index
    %c0_24 = arith.constant 0 : index
    %65 = vector.load %arg7[%c0_23, %c0_24] : memref<8x1xf32, #tpu.memory_space<vmem>>, vector<8x1xf32>
    %66 = arith.mulf %65, %53 : vector<8x1xf32>
    %67 = arith.addf %66, %58 : vector<8x1xf32>
    %68 = arith.addf %67, %64 : vector<8x1xf32>
    %c0_25 = arith.constant 0 : index
    %c0_26 = arith.constant 0 : index
    %69 = vector.load %arg7[%c0_25, %c0_26] : memref<8x1xf32, #tpu.memory_space<vmem>>, vector<8x1xf32>
    tpu.vector_store %arg7[%c0_25, %c0_26], %68 {strides = array<i32>} : memref<8x1xf32, #tpu.memory_space<vmem>>, vector<8x1xf32>,
    %c0_27 = arith.constant 0 : index
    %c0_28 = arith.constant 0 : index
    %70 = vector.load %arg6[%c0_27, %c0_28] : memref<8x1xf32, #tpu.memory_space<vmem>>, vector<8x1xf32>
    tpu.vector_store %arg6[%c0_27, %c0_28], %51 {strides = array<i32>} : memref<8x1xf32, #tpu.memory_space<vmem>>, vector<8x1xf32>,
    %c0_29 = arith.constant 0 : index
    %c0_30 = arith.constant 0 : index
    %71 = vector.load %arg8[%c0_29, %c0_30] : memref<8x1xf32, #tpu.memory_space<vmem>>, vector<8x1xf32>
    %72 = arith.mulf %26, %45 : vector<8x1xf32>
    %73 = arith.addf %71, %72 : vector<8x1xf32>
    %c0_31 = arith.constant 0 : index
    %c0_32 = arith.constant 0 : index
    %74 = vector.load %arg8[%c0_31, %c0_32] : memref<8x1xf32, #tpu.memory_space<vmem>>, vector<8x1xf32>
    tpu.vector_store %arg8[%c0_31, %c0_32], %73 {strides = array<i32>} : memref<8x1xf32, #tpu.memory_space<vmem>>, vector<8x1xf32>,
    %c2_i32 = arith.constant 2 : i32
    %75 = arith.cmpi eq, %arg1, %c2_i32 : i32
    %76 = arith.extui %75 : i1 to i32
    %c0_i32_33 = arith.constant 0 : i32
    %77 = arith.cmpi ne, %76, %c0_i32_33 : i32
    scf.if %77 {
      %c0_34 = arith.constant 0 : index
      %c0_35 = arith.constant 0 : index
      %78 = vector.load %arg6[%c0_34, %c0_35] : memref<8x1xf32, #tpu.memory_space<vmem>>, vector<8x1xf32>
      %c0_36 = arith.constant 0 : index
      %c0_37 = arith.constant 0 : index
      %79 = vector.load %arg7[%c0_36, %c0_37] : memref<8x1xf32, #tpu.memory_space<vmem>>, vector<8x1xf32>
      %80 = math.log %79 : vector<8x1xf32>
      %81 = arith.addf %78, %80 : vector<8x1xf32>
      %c0_38 = arith.constant 0 : index
      %c0_39 = arith.constant 0 : index
      %82 = vector.load %arg8[%c0_38, %c0_39] : memref<8x1xf32, #tpu.memory_space<vmem>>, vector<8x1xf32>
      %83 = arith.subf %81, %82 : vector<8x1xf32>
      %c0_40 = arith.constant 0 : index
      %c0_41 = arith.constant 0 : index
      %84 = vector.load %arg5[%c0_40, %c0_41] : memref<8x1xf32, #tpu.memory_space<vmem>>, vector<8x1xf32>
      tpu.vector_store %arg5[%c0_40, %c0_41], %83 {strides = array<i32>} : memref<8x1xf32, #tpu.memory_space<vmem>>, vector<8x1xf32>,
    } else {
    }
    return
  }
  func.func @transform_0(%arg0: i32, %arg1: i32) -> (i32, i32) {
    %c0_i32 = arith.constant 0 : i32
    %c0_i32_0 = arith.constant 0 : i32
    return %arg0, %c0_i32 : i32, i32
  }
  func.func @transform_1(%arg0: i32, %arg1: i32) -> (i32, i32) {
    %c0_i32 = arith.constant 0 : i32
    %c0_i32_0 = arith.constant 0 : i32
    return %c0_i32, %arg1 : i32, i32
  }
  func.func @transform_2(%arg0: i32, %arg1: i32) -> (i32, i32) {
    %c0_i32 = arith.constant 0 : i32
    %c0_i32_0 = arith.constant 0 : i32
    return %arg0, %c0_i32 : i32, i32
  }
  func.func @transform_3(%arg0: i32, %arg1: i32) -> (i32, i32) {
    %c0_i32 = arith.constant 0 : i32
    %c0_i32_0 = arith.constant 0 : i32
    return %arg0, %c0_i32 : i32, i32
  }
}

</mosaic_0001>

<llo_original>
// kernel: tpu_custom_call.1
$region0: #{tpu_custom_call.1}
  #allocation0 [shape = 'u32[]', space=smem, size = 0x4, offset = 0x4, fixed_abs, tag = 'smem constant byte address 0x4 - core index']
  #allocation1 [shape = 'u32[72,128]{1,0:T(1,128)}', space=vmem, size = 0x9000, scoped, tag = 'internal scratch']
  #allocation2 [shape = 'f32[8,1]{1,0:T(8,128)}', space=vmem, size = 0x1000, scoped, tag = 'scratch operand']
  #allocation3 [shape = 'f32[8,1]{1,0:T(8,128)}', space=vmem, size = 0x1000, scoped, tag = 'scratch operand']
  #allocation4 [shape = 'f32[8,1]{1,0:T(8,128)}', space=vmem, size = 0x1000, scoped, tag = 'scratch operand']
  %s0 = inlined_call_operand.vmem [shape: f32[16,128], index: 0, kind: input, shape index: {}]
  %s1 = inlined_call_operand.hbm [shape: f32[128,384], index: 1, kind: input, shape index: {}]
  %s2 = inlined_call_operand.vmem [shape: s32[16,1], index: 2, kind: input, shape index: {}]
  %s3 = inlined_call_operand.vmem [shape: f32[16,1], index: 3, kind: output, shape index: {}]
  %s4 = sld [smem:[#allocation0]]
  $region57: #{tpu_custom_call.1} parent=0
    _
  %s6 = ssub.s32 1, %s4
  %s7 = scalar_select 0, %s6, %s4
  $region1: #{tpu_custom_call.1} parent=0
    #allocation5 [shape = 'u8[131072]{0}', space=vmem, size = 0x20000, scoped, tag = 'input window, operand 1']
    #allocation6 [shape = 's32[2]{0}', space=sflag, size = 0x8, scoped, tag = 'scoped memory for tpu_custom_call.1']
    %8 = vsyncpa [#allocation6], 0
    %s9 = scalar_lea.sflag [#allocation6], 1
    %10 = vsyncpa %s9, 0
    loop: start=0, step=1, limit=8
    $region2: #{tpu_custom_call.1} parent=1 // loop_pre_header
      _
    $region3: #{tpu_custom_call.1} parent=1 // loop_header
      %s12 = sphi 0, %s16
      %p13 = scmp.ge.s32.totalorder %s12, 8
      %s19 = sphi 0, %s31
      %s20 = sphi 0, %s27
      %s21 = sphi 0, %s19
      %s22 = sphi 0, %s20
      %s23 = sphi 0, %s21
      %s24 = sphi 0, %s22
      %s34 = sphi 0, %s36
      %s37 = sphi 0, %s34
      %s38 = sphi 0, %s37
      %s54 = sphi 0, %s38
      %s60 = sphi 0, %s62
      %s63 = sphi 0, %s60
      %s64 = sphi 0, %s63
      %s80 = sphi 0, %s64
      %s86 = sphi 0, %s88
      %s89 = sphi 0, %s86
      %s90 = sphi 0, %s89
      %s106 = sphi 0, %s90
      %s112 = sphi 0, %s114
      %s115 = sphi 0, %s112
      %s116 = sphi 0, %s115
      %s132 = sphi 0, %s116
    $region4: #{tpu_custom_call.1} parent=1 // loop_header_branch
      %15 = sbr.rel (%p13) target = $region8
    $region5: #{tpu_custom_call.1} parent=1 // loop_body
      %s17 = ssub.s32 %s12, 1
      %s18 = ssub.s32 %s12, 2
      %s25 = sadd.s32 1, %s20
      %p26 = scmp.ge.s32.totalorder %s25, 3
      %s27 = scalar_select %p26, 0, %s25
      %s28 = sadd.s32 1, %s19
      %s29 = scalar_select %p26, %s28, %s19
      %p30 = scmp.ge.s32.totalorder %s29, 2
      %s31 = scalar_select %p30, 0, %s29
      %s32 = ssub.s32 %s19, %s31
      %p33 = scmp.eq.s32.totalorder %s32, 0
      %s35 = sadd.s32 %s34, 1
      %s36 = scalar_select %p33, %s34, %s35
      %p39 = pneg %p33
      %p40 = scmp.eq.s32.totalorder %s12, 5
      %p41 = por %p39, %p40
      %p42 = scmp.ne.s32.totalorder %s34, %s37
      %p43 = scmp.eq.s32.totalorder %s12, 0
      %p44 = por %p42, %p43
      %p45 = scmp.ne.s32.totalorder %s34, %s37
      %p46 = scmp.eq.s32.totalorder %s17, 5
      %p47 = por %p45, %p46
      %p48 = scmp.ne.s32.totalorder %s37, %s38
      %p49 = scmp.eq.s32.totalorder %s17, 0
      %p50 = por %p48, %p49
      %p51 = scmp.ne.s32.totalorder %s37, %s38
      %p52 = scmp.eq.s32.totalorder %s18, 5
      %p53 = por %p51, %p52
      %p55 = scmp.ne.s32.totalorder %s38, %s54
      %p56 = scmp.eq.s32.totalorder %s18, 0
      %p57 = por %p55, %p56
      %s58 = ssub.s32 %s20, %s27
      %p59 = scmp.eq.s32.totalorder %s58, 0
      %s61 = sadd.s32 %s60, 1
      %s62 = scalar_select %p59, %s60, %s61
      %p65 = pneg %p59
      %p66 = scmp.eq.s32.totalorder %s12, 5
      %p67 = por %p65, %p66
      %p68 = scmp.ne.s32.totalorder %s60, %s63
      %p69 = scmp.eq.s32.totalorder %s12, 0
      %p70 = por %p68, %p69
      %p71 = scmp.ne.s32.totalorder %s60, %s63
      %p72 = scmp.eq.s32.totalorder %s17, 5
      %p73 = por %p71, %p72
      %p74 = scmp.ne.s32.totalorder %s63, %s64
      %p75 = scmp.eq.s32.totalorder %s17, 0
      %p76 = por %p74, %p75
      %p77 = scmp.ne.s32.totalorder %s63, %s64
      %p78 = scmp.eq.s32.totalorder %s18, 5
      %p79 = por %p77, %p78
      %p81 = scmp.ne.s32.totalorder %s64, %s80
      %p82 = scmp.eq.s32.totalorder %s18, 0
      %p83 = por %p81, %p82
      %s84 = ssub.s32 %s19, %s31
      %p85 = scmp.eq.s32.totalorder %s84, 0
      %s87 = sadd.s32 %s86, 1
      %s88 = scalar_select %p85, %s86, %s87
      %p91 = pneg %p85
      %p92 = scmp.eq.s32.totalorder %s12, 5
      %p93 = por %p91, %p92
      %p94 = scmp.ne.s32.totalorder %s86, %s89
      %p95 = scmp.eq.s32.totalorder %s12, 0
      %p96 = por %p94, %p95
      %p97 = scmp.ne.s32.totalorder %s86, %s89
      %p98 = scmp.eq.s32.totalorder %s17, 5
      %p99 = por %p97, %p98
      %p100 = scmp.ne.s32.totalorder %s89, %s90
      %p101 = scmp.eq.s32.totalorder %s17, 0
      %p102 = por %p100, %p101
      %p103 = scmp.ne.s32.totalorder %s89, %s90
      %p104 = scmp.eq.s32.totalorder %s18, 5
      %p105 = por %p103, %p104
      %p107 = scmp.ne.s32.totalorder %s90, %s106
      %p108 = scmp.eq.s32.totalorder %s18, 0
      %p109 = por %p107, %p108
      %s110 = ssub.s32 %s19, %s31
      %p111 = scmp.eq.s32.totalorder %s110, 0
      %s113 = sadd.s32 %s112, 1
      %s114 = scalar_select %p111, %s112, %s113
      %p117 = pneg %p111
      %p118 = scmp.eq.s32.totalorder %s12, 5
      %p119 = por %p117, %p118
      %p120 = scmp.ne.s32.totalorder %s112, %s115
      %p121 = scmp.eq.s32.totalorder %s12, 0
      %p122 = por %p120, %p121
      %p123 = scmp.ne.s32.totalorder %s112, %s115
      %p124 = scmp.eq.s32.totalorder %s17, 5
      %p125 = por %p123, %p124
      %p126 = scmp.ne.s32.totalorder %s115, %s116
      %p127 = scmp.eq.s32.totalorder %s17, 0
      %p128 = por %p126, %p127
      %p129 = scmp.ne.s32.totalorder %s115, %s116
      %p130 = scmp.eq.s32.totalorder %s18, 5
      %p131 = por %p129, %p130
      %p133 = scmp.ne.s32.totalorder %s116, %s132
      %p134 = scmp.eq.s32.totalorder %s18, 0
      %p135 = por %p133, %p134
      %p136 = scmp.le.s32.totalorder 1, %s12
      %p137 = scmp.lt.s32.totalorder %s12, 7
      %p138 = pnand %p136, %p137
      %p139 = pneg %p138
      // Predicated region
      $region9: #{tpu_custom_call.1} parent=5 // pred_check
        _
      $region10: #{tpu_custom_call.1} parent=5 // pred_check_branch
        %141 = sbr.rel (%p138) target = $region12
      $region11: #{tpu_custom_call.1} parent=5 // pred_region
        %s142 = ssub.s32 %s12, 1
      $region12: #{tpu_custom_call.1} parent=5 // pred_fallthru
        _
      %p143 = scmp.lt.s32.totalorder %s12, 6
      // Predicated region
      $region13: #{tpu_custom_call.1} parent=5 // pred_check
        %p144 = pneg %p143
      $region14: #{tpu_custom_call.1} parent=5 // pred_check_branch
        %146 = sbr.rel (%p144) target = $region16
      $region15: #{tpu_custom_call.1} parent=5 // pred_region
        // Predicated region
        $region17: #{tpu_custom_call.1} parent=15 // pred_check
          %p147 = pneg %p44
        $region18: #{tpu_custom_call.1} parent=15 // pred_check_branch
          %149 = sbr.rel (%p147) target = $region20
        $region19: #{tpu_custom_call.1} parent=15 // pred_region
          %p150 = scmp.lt.s32.totalorder %s19, 1
          %s151 = scalar_select %p150, %s19, 1
          %s152 = smul.addr %s151, 8
          %s153 = scalar_lea.vmem %s0, %s152
        $region20: #{tpu_custom_call.1} parent=15 // pred_fallthru
          _
        // Predicated region
        $region21: #{tpu_custom_call.1} parent=15 // pred_check
          %p154 = pneg %p70
        $region22: #{tpu_custom_call.1} parent=15 // pred_check_branch
          %156 = sbr.rel (%p154) target = $region24
        $region23: #{tpu_custom_call.1} parent=15 // pred_region
          %s157 = sand.u32 %s60, 1
          %s158 = scalar_lea.sflag [#allocation6], %s157
          %s159 = sand.u32 %s60, 1
          %s160 = smul.addr %s159, 128
          %s161 = scalar_lea.vmem [#allocation5], %s160
          %163 = vsyncadd %s158, 0
          %s164 = smul.addr %s20, 8
          %s165 = scalar_lea.hbm %s1, %s164
          %s166 = sshll.u32 %s165, 4
          %s167 = int_to_ptr.hbm [resolvable:$true] %s166
          %s168 = sshll.u32 %s161, 4
          %s169 = int_to_ptr.vmem [resolvable:$true] %s168
          %174 = dma.hbm_to_vmem [thread:$0]  %s167, 2048, %s169, %s158, 384, 128, 8
        $region24: #{tpu_custom_call.1} parent=15 // pred_fallthru
          _
        // Predicated region
        $region25: #{tpu_custom_call.1} parent=15 // pred_check
          %p175 = pneg %p96
        $region26: #{tpu_custom_call.1} parent=15 // pred_check_branch
          %177 = sbr.rel (%p175) target = $region28
        $region27: #{tpu_custom_call.1} parent=15 // pred_region
          %p178 = scmp.lt.s32.totalorder %s19, 1
          %s179 = scalar_select %p178, %s19, 1
          %s180 = smul.addr %s179, 8
          %s181 = scalar_lea.vmem %s2, %s180
        $region28: #{tpu_custom_call.1} parent=15 // pred_fallthru
          _
      $region16: #{tpu_custom_call.1} parent=5 // pred_fallthru
        _
      %p182 = scmp.le.s32.totalorder 1, %s12
      %p183 = scmp.lt.s32.totalorder %s12, 7
      %p184 = pnand %p182, %p183
      %p185 = pneg %p184
      // Predicated region
      $region29: #{tpu_custom_call.1} parent=5 // pred_check
        _
      $region30: #{tpu_custom_call.1} parent=5 // pred_check_branch
        %187 = sbr.rel (%p184) target = $region32
      $region31: #{tpu_custom_call.1} parent=5 // pred_region
        %s188 = ssub.s32 %s12, 1
        %s189 = sand.u32 %s63, 1
        %s190 = scalar_lea.sflag [#allocation6], %s189
        %s191 = sand.u32 %s63, 1
        %s192 = smul.addr %s191, 128
        %s193 = scalar_lea.vmem [#allocation5], %s192
        // Predicated region
        $region33: #{tpu_custom_call.1} parent=31 // pred_check
          %p194 = pneg %p76
        $region34: #{tpu_custom_call.1} parent=31 // pred_check_branch
          %196 = sbr.rel (%p194) target = $region36
        $region35: #{tpu_custom_call.1} parent=31 // pred_region
          %198 = dma.done %s190, 2048
        $region36: #{tpu_custom_call.1} parent=31 // pred_fallthru
          _
        %p199 = scmp.lt.s32.totalorder %s21, 1
        %s200 = scalar_select %p199, %s21, 1
        %s201 = smul.addr %s200, 8
        %s202 = scalar_lea.vmem %s0, %s201
        %p203 = pneg %p50
        %p204 = pneg %p47
        %s205 = sand.u32 %s63, 1
        %s206 = scalar_lea.sflag [#allocation6], %s205
        %s207 = sand.u32 %s63, 1
        %s208 = smul.addr %s207, 128
        %s209 = scalar_lea.vmem [#allocation5], %s208
        %p210 = pneg %p76
        %p211 = pneg %p73
        %p212 = scmp.lt.s32.totalorder %s21, 1
        %s213 = scalar_select %p212, %s21, 1
        %s214 = smul.addr %s213, 8
        %s215 = scalar_lea.vmem %s2, %s214
        %p216 = pneg %p102
        %p217 = pneg %p99
        %p218 = pneg %p128
        %p219 = pneg %p125
        %p220 = scmp.lt.s32.totalorder %s21, 1
        %s221 = scalar_select %p220, %s21, 1
        %s222 = smul.addr %s221, 8
        %s223 = scalar_lea.vmem %s3, %s222
        %p224 = scmp.lt.s32.totalorder %s21, 1
        %s225 = scalar_select %p224, %s21, 1
        %s226 = smul.addr %s225, 8
        %s227 = scalar_lea.vmem %s0, %s226
        %p228 = scmp.lt.s32.totalorder %s21, 1
        %s229 = scalar_select %p228, %s21, 1
        %s230 = smul.addr %s229, 8
        %s231 = scalar_lea.vmem %s2, %s230
        %p232 = scmp.lt.s32.totalorder %s21, 1
        %s233 = scalar_select %p232, %s21, 1
        %s234 = smul.addr %s233, 8
        %s235 = scalar_lea.vmem %s3, %s234
        %p236 = scmp.eq.s32.totalorder %s22, 0
        // Predicated region
        $region37: #{tpu_custom_call.1} parent=31 // pred_check
          %p237 = pneg %p236
        $region38: #{tpu_custom_call.1} parent=31 // pred_check_branch
          %239 = sbr.rel (%p237) target = $region40
        $region39: #{tpu_custom_call.1} parent=31 // pred_region
          %vm240 = vcmask 7168
          %241 = vst.msk [vmem:[#allocation2] sm:$0xff] %vm240, -inf
          %242 = vst.msk [vmem:[#allocation3] sm:$0xff] %vm240, 0.0
          %243 = vst.msk [vmem:[#allocation4] sm:$0xff] %vm240, 0.0
        $region40: #{tpu_custom_call.1} parent=31 // pred_fallthru
          _
        %v244 = vld [vmem:[%s227] sm:$0xff]
        %v245 = vld [vmem:[%s193] sm:$0xff]
        %v246 = vld [vmem:[%s193 + $0x8] sm:$0xff]
        %v247 = vld [vmem:[%s193 + $0x10] sm:$0xff]
        %v248 = vld [vmem:[%s193 + $0x18] sm:$0xff]
        %v249 = vld [vmem:[%s193 + $0x20] sm:$0xff]
        %v250 = vld [vmem:[%s193 + $0x28] sm:$0xff]
        %v251 = vld [vmem:[%s193 + $0x30] sm:$0xff]
        %v252 = vld [vmem:[%s193 + $0x38] sm:$0xff]
        %v253 = vld [vmem:[%s193 + $0x40] sm:$0xff]
        %v254 = vld [vmem:[%s193 + $0x48] sm:$0xff]
        %v255 = vld [vmem:[%s193 + $0x50] sm:$0xff]
        %v256 = vld [vmem:[%s193 + $0x58] sm:$0xff]
        %v257 = vld [vmem:[%s193 + $0x60] sm:$0xff]
        %v258 = vld [vmem:[%s193 + $0x68] sm:$0xff]
        %v259 = vld [vmem:[%s193 + $0x70] sm:$0xff]
        %v260 = vld [vmem:[%s193 + $0x78] sm:$0xff]
        %261 = vmatpush.msra.mxu0 %v260
        %262 = vmatpush.msra.mxu0 %v259
        %263 = vmatpush.msra.mxu0 %v258
        %264 = vmatpush.msra.mxu0 %v257
        %265 = vmatpush.msra.mxu0 %v256
        %266 = vmatpush.msra.mxu0 %v255
        %267 = vmatpush.msra.mxu0 %v254
        %268 = vmatpush.msra.mxu0 %v253
        %269 = vmatpush.msra.mxu0 %v252
        %270 = vmatpush.msra.mxu0 %v251
        %271 = vmatpush.msra.mxu0 %v250
        %272 = vmatpush.msra.mxu0 %v249
        %273 = vmatpush.msra.mxu0 %v248
        %274 = vmatpush.msra.mxu0 %v247
        %275 = vmatpush.msra.mxu0 %v246
        %276 = vmatpush.msra.mxu0 %v245
        %277 = vmatmul.f32.gmra.mxu0 %v244
        %v278 = vpop.f32.mrf.mxu0
        %v279 = vadd.f32 0.0, %v278
        %280 = vdwg.mxu0
        %v281 = vmax.f32 %v279, -0.9999999
        %v282 = vmin.f32 %v281, 0.9999999
        %v283 = vmul.f32 %v282, 64.0
        %v284 = vld [vmem:[%s231] sm:$0xff]
        %s285 = smul.u32 %s22, 128
        %v286 = vstv %s285
        %v287 = vsub.s32 %v284, %v286
        %v288 = vlaneseq
        %v289 = vand.u32 %v288, 127
        %290 = vset.pattern.permute.xlu0 0
        %291 = vperm.xlu0 %290, %v287
        %v292 = vpop.permute.xlu0 %291
        %vm293 = vcmp.eq.s32.totalorder %v289, %v292
        %vm294 = vcmp.ge.s32.totalorder %v287, 0
        %vm295 = vcmp.lt.s32.totalorder %v287, 128
        %vm296 = vmand %vm294, %vm295
        %v297 = vsel %vm296, 1, 0
        %v298 = vcvt.s32.f32 %v297
        %v299 = vsel %vm293, %v282, 0.0
        %300 = vadd.xlane.f32.xlu0 %v299
        %v301 = vpop.xlane.xlu0 %300
        %v302 = vmul.f32 %v301, %v301
        %v303 = vsub.f32 1.0, %v302
        %v304 = vmax.f32 %v303, 0.0
        %v305 = vrsqrt.pop %v304
        %v306 = vmul.f32 %v305, %v304
        %v307 = vmul.f32 %v306, %v305
        %v308 = vmul.f32 0.5, %v307
        %v309 = vsub.f32 1.5, %v308
        %v310 = vmul.f32 %v305, %v309
        %v311 = vmul.f32 %v304, %v310
        %vm312 = vcmp.eq.f32.partialorder %v304, inf
        %v313 = vsel %vm312, %v304, %v311
        %vm314 = vcmp.eq.f32.partialorder %v304, 0.0
        %v315 = vand.u32 %v304, 2147483648
        %v316 = vsel %vm314, %v315, %v313
        %v317 = vmul.f32 %v301, 64.0
        %v318 = vmul.f32 %v301, 0.87758255
        %v319 = vmul.f32 %v316, 0.47942555
        %v320 = vsub.f32 %v318, %v319
        %v321 = vmul.f32 %v320, 64.0
        %v322 = vld [vmem:[#allocation2] sm:$0xff]
        %323 = vmax.xlane.f32.xlu0 %v283
        %v324 = vpop.xlane.xlu0 %323
        %v325 = vmax.f32 %v324, %v321
        %v326 = vsel %vm296, %v325, %v324
        %v327 = vmax.f32 %v322, %v326
        %v328 = vsub.f32 %v322, %v327
        %v329 = vmul.f32 %v328, 1.442695
        %v330 = vpow.pop %v329
        %332 = vset.pattern.permute.xlu0 0
        %333 = vperm.xlu0 %332, %v327
        %v334 = vpop.permute.xlu0 %333
        %v336 = vsub.f32 %v283, %v334
        %v337 = vmul.f32 %v336, 1.442695
        %v338 = vpow.pop %v337
        %339 = vadd.xlane.f32.xlu0 %v338
        %v340 = vpop.xlane.xlu0 %339
        %v341 = vsub.f32 %v321, %v327
        %v342 = vmul.f32 %v341, 1.442695
        %v343 = vpow.pop %v342
        %v344 = vsub.f32 %v317, %v327
        %v345 = vmul.f32 %v344, 1.442695
        %v346 = vpow.pop %v345
        %v347 = vsub.f32 %v343, %v346
        %v348 = vmul.f32 %v298, %v347
        %v349 = vld [vmem:[#allocation3] sm:$0xff]
        %v350 = vmul.f32 %v349, %v330
        %v351 = vadd.f32 %v350, %v340
        %v352 = vadd.f32 %v351, %v348
        %vm353 = vcmask 7168
        %354 = vst.msk [vmem:[#allocation3] sm:$0xff] %vm353, %v352
        %355 = vst.msk [vmem:[#allocation2] sm:$0xff] %vm353, %v327
        %v356 = vld [vmem:[#allocation4] sm:$0xff]
        %v357 = vmul.f32 %v298, %v321
        %v358 = vadd.f32 %v356, %v357
        %359 = vst.msk [vmem:[#allocation4] sm:$0xff] %vm353, %v358
        %p360 = scmp.eq.s32.totalorder %s22, 2
        // Predicated region
        $region41: #{tpu_custom_call.1} parent=31 // pred_check
          %p361 = pneg %p360
        $region42: #{tpu_custom_call.1} parent=31 // pred_check_branch
          %363 = sbr.rel (%p361) target = $region44
        $region43: #{tpu_custom_call.1} parent=31 // pred_region
          %v364 = vld [vmem:[#allocation2] sm:$0xff]
          %v365 = vld [vmem:[#allocation3] sm:$0xff]
          %v366 = vlog2.pop %v365
          %v367 = vmul.f32 %v366, 0.6931472
          %v368 = vadd.f32 %v364, %v367
          %v369 = vld [vmem:[#allocation4] sm:$0xff]
          %v370 = vsub.f32 %v368, %v369
          %371 = vst.msk [vmem:[%s235] sm:$0xff] %vm353, %v370
        $region44: #{tpu_custom_call.1} parent=31 // pred_fallthru
          _
        %p372 = scmp.lt.s32.totalorder %s21, 1
        %s373 = scalar_select %p372, %s21, 1
        %s374 = smul.addr %s373, 8
        %s375 = scalar_lea.vmem %s3, %s374
        // Predicated region
        $region45: #{tpu_custom_call.1} parent=31 // pred_check
          %p376 = pneg %p125
        $region46: #{tpu_custom_call.1} parent=31 // pred_check_branch
          %378 = sbr.rel (%p376) target = $region48
        $region47: #{tpu_custom_call.1} parent=31 // pred_region
          _
        $region48: #{tpu_custom_call.1} parent=31 // pred_fallthru
          _
      $region32: #{tpu_custom_call.1} parent=5 // pred_fallthru
        _
      %p379 = scmp.le.s32.totalorder 2, %s12
      // Predicated region
      $region49: #{tpu_custom_call.1} parent=5 // pred_check
        %p380 = pneg %p379
      $region50: #{tpu_custom_call.1} parent=5 // pred_check_branch
        %382 = sbr.rel (%p380) target = $region52
      $region51: #{tpu_custom_call.1} parent=5 // pred_region
        %s383 = ssub.s32 %s12, 2
        // Predicated region
        $region53: #{tpu_custom_call.1} parent=51 // pred_check
          %p384 = pneg %p131
        $region54: #{tpu_custom_call.1} parent=51 // pred_check_branch
          %386 = sbr.rel (%p384) target = $region56
        $region55: #{tpu_custom_call.1} parent=51 // pred_region
          %p387 = scmp.lt.s32.totalorder %s23, 1
          %s388 = scalar_select %p387, %s23, 1
          %s389 = smul.addr %s388, 8
          %s390 = scalar_lea.vmem %s3, %s389
        $region56: #{tpu_custom_call.1} parent=51 // pred_fallthru
          _
      $region52: #{tpu_custom_call.1} parent=5 // pred_fallthru
        _
    $region6: #{tpu_custom_call.1} parent=1 // loop_footer
      %s16 = sadd.s32 1, %s12
    $region7: #{tpu_custom_call.1} parent=1 // loop_footer_branch
      %11 = sbr.rel target = $region3
    $region8: #{tpu_custom_call.1} parent=1 // loop_exit
      _
    %391 = vsyncpa [#allocation6], 1
    %s392 = scalar_lea.sflag [#allocation6], 1
    %393 = vsyncpa %s392, 1

</llo_original>
